<compile_context>
chip_gen: v5e
topology: v5e:2x2
jax: 0.10.0
libtpu: 0.0.40
codegen_flags: <defaults>
</compile_context>

<pallas_src>
import functools

import jax
import jax.numpy as jnp
from jax.experimental import pallas as pl
from jax.experimental.pallas import tpu as pltpu


# ---------------------------------------------------------------------------
# helpers
# ---------------------------------------------------------------------------
def _round_up(n, m):
    return ((n + m - 1) // m) * m


def _vmem_capacity():
    """Physical VMEM bytes for the current chip (conservative fallback)."""
    try:
        cap = getattr(pltpu.get_tpu_info(), "vmem_capacity_bytes", None)
        if cap:
            return int(cap)
    except Exception:
        pass
    return 64 << 20  # v7x per-TC VMEM (smallest of the supported generations)


def _row_split(m):
    """(grid_m, tm): split gram rows across TensorCores only when the kernel
    is clearly MXU-bound (large B*C); the rhs re-read makes it a loss in the
    memory-bound regime."""
    if m >= 1024 and m % 512 == 0:
        return 2, m // 2          # tm is a multiple of 256 (full MXU tiles)
    return 1, m


def _choose_tk(rows_per_step, k, capacity):
    """Feature-tile width along K: as large as the VMEM budget allows
    (double-buffered f32 tiles), 128-aligned, but keeping a few grid steps
    so the feature DMA pipelines behind the MXU."""
    hard_cap = 16384 if capacity >= (96 << 20) else 8192
    budget = max(capacity // 3, 4 << 20)
    max_cols = budget // (2 * 4 * max(rows_per_step, 1))
    max_cols = max(128, (max_cols // 128) * 128)
    max_cols = min(max_cols, hard_cap)
    if k >= 2048:                                   # aim for >= 4 pipelined steps
        max_cols = min(max_cols, max(128, _round_up(-(-k // 4), 128)))
    elif k > 512:                                   # aim for >= 2 steps
        max_cols = min(max_cols, max(128, _round_up(-(-k // 2), 128)))
    if k <= max_cols:
        return k                  # single full-extent block, no masking needed
    return max_cols               # 128-multiple; tail tile masked in-kernel


def _vmem_limit(rows_per_step, tk, tm, m, capacity):
    """Scoped-VMEM request: actual need + margin, capped at 3/4 physical."""
    lane_m = max(_round_up(m, 128), 128)
    sub_tm = max(_round_up(tm, 8), 8)
    feat = 2 * 4 * rows_per_step * tk          # double-buffered f32 feature tiles
    gram = 4 * 4 * sub_tm * lane_m             # acc / target slab / output buffers
    need = feat + gram + (4 << 20)
    return int(min(max(need, 32 << 20), (capacity * 3) // 4))


# ---------------------------------------------------------------------------
# kernel building blocks
# ---------------------------------------------------------------------------
def _masked_bf16(ref, kk, tk, k_true):
    """Load a feature tile, zero the out-of-range tail columns (only when K is
    not a multiple of TK) and cast to bf16 for the MXU."""
    f = ref[...]
    if k_true % tk != 0:
        col = jax.lax.broadcasted_iota(jnp.int32, f.shape, 1) + kk * tk
        f = jnp.where(col < k_true, f, jnp.zeros_like(f))
    return f.astype(jnp.bfloat16)


def _gram_kernel(*refs, split, inv_norm, k_true, tk):
    """Accumulate G += F_k @ F_k^T over K tiles directly into the output
    block (resident in VMEM across the 'arbitrary' K axis); scale on the
    last step."""
    if split:
        lhs_ref, rhs_ref, gram_ref = refs
    else:
        feat_ref, gram_ref = refs
        lhs_ref = rhs_ref = feat_ref
    kk = pl.program_id(1)

    @pl.when(kk == 0)
    def _():
        gram_ref[...] = jnp.zeros_like(gram_ref)

    lhs = _masked_bf16(lhs_ref, kk, tk, k_true)
    rhs = lhs if not split else _masked_bf16(rhs_ref, kk, tk, k_true)
    gram_ref[...] += jax.lax.dot_general(
        lhs, rhs, (((1,), (1,)), ((), ())), preferred_element_type=jnp.float32)

    @pl.when(kk == pl.num_programs(1) - 1)
    def _():
        gram_ref[...] = gram_ref[...] * inv_norm


def _loss_kernel(*refs, split, inv_norm, k_true, tk, tm):
    """Gram accumulation over K tiles in a VMEM scratch (x-gram never hits
    HBM); MSE partial sum vs. the DMA'd target row slab on the last step."""
    if split:
        lhs_ref, rhs_ref, tgt_hbm, out_ref, acc_ref, tgt_vmem, sem = refs
    else:
        feat_ref, tgt_hbm, out_ref, acc_ref, tgt_vmem, sem = refs
        lhs_ref = rhs_ref = feat_ref
    i = pl.program_id(0)
    kk = pl.program_id(1)

    def tgt_copy():
        return pltpu.make_async_copy(
            tgt_hbm.at[pl.ds(i * tm, tm), :], tgt_vmem, sem)

    @pl.when(kk == 0)
    def _():
        acc_ref[...] = jnp.zeros_like(acc_ref)
        tgt_copy().start()        # overlap the target-slab DMA with the K loop

    lhs = _masked_bf16(lhs_ref, kk, tk, k_true)
    rhs = lhs if not split else _masked_bf16(rhs_ref, kk, tk, k_true)
    acc_ref[...] += jax.lax.dot_general(
        lhs, rhs, (((1,), (1,)), ((), ())), preferred_element_type=jnp.float32)

    @pl.when(kk == pl.num_programs(1) - 1)
    def _():
        tgt_copy().wait()
        g = acc_ref[...] * inv_norm                 # scale once, post-matmul
        d = g - tgt_vmem[...]
        sq = d * d
        sse = jnp.sum(jnp.sum(sq, axis=1, keepdims=True))   # lanes, then sublanes
        out_ref[...] = jnp.full(out_ref.shape, sse, dtype=jnp.float32)


# ---------------------------------------------------------------------------
# wrappers
# ---------------------------------------------------------------------------
def gram_matrix(x):
    """Pallas equivalent of the PyTorch gram_matrix helper.  x: [B, C, H, W].
    Returns the (B*C, B*C) f32 gram, normalized by B*C*H*W."""
    b, c, h, w = x.shape
    m, k = b * c, h * w
    feats = x.reshape(m, k)                       # free view; no pad, no cast
    grid_m, tm = _row_split(m)
    cap = _vmem_capacity()
    rows_per_step = tm if grid_m == 1 else tm + m
    tk = _choose_tk(rows_per_step, k, cap)
    nk = -(-k // tk)
    inv_norm = 1.0 / float(b * c * h * w)

    kernel = functools.partial(_gram_kernel, split=(grid_m > 1),
                               inv_norm=inv_norm, k_true=k, tk=tk)
    if grid_m == 1:
        in_specs = [pl.BlockSpec((m, tk), lambda i, kk: (0, kk))]
        operands = (feats,)
    else:
        in_specs = [pl.BlockSpec((tm, tk), lambda i, kk: (i, kk)),
                    pl.BlockSpec((m, tk), lambda i, kk: (0, kk))]
        operands = (feats, feats)

    return pl.pallas_call(
        kernel,
        grid=(grid_m, nk),
        out_shape=jax.ShapeDtypeStruct((m, m), jnp.float32),
        in_specs=in_specs,
        out_specs=pl.BlockSpec((tm, m), lambda i, kk: (i, 0)),
        compiler_params=pltpu.CompilerParams(
            dimension_semantics=("parallel", "arbitrary"),
            vmem_limit_bytes=_vmem_limit(rows_per_step, tk, tm, m, cap),
        ),
    )(*operands)


def style_loss_forward(x, target_gram):
    """Returns (x_unchanged, mse_loss(gram(x), target_gram))."""
    b, c, h, w = x.shape
    m, k = b * c, h * w
    if target_gram.shape != (m, m):
        raise ValueError(f"target gram shape {target_gram.shape} != {(m, m)}")
    target_gram = target_gram.astype(jnp.float32)
    feats = x.reshape(m, k)                       # free view; no pad, no cast
    grid_m, tm = _row_split(m)
    cap = _vmem_capacity()
    rows_per_step = tm if grid_m == 1 else tm + m
    tk = _choose_tk(rows_per_step, k, cap)
    nk = -(-k // tk)
    inv_norm = 1.0 / float(b * c * h * w)
    inv_count = 1.0 / float(m * m)

    kernel = functools.partial(_loss_kernel, split=(grid_m > 1),
                               inv_norm=inv_norm, k_true=k, tk=tk, tm=tm)
    if grid_m == 1:
        in_specs = [pl.BlockSpec((m, tk), lambda i, kk: (0, kk)),
                    pl.BlockSpec(memory_space=pl.ANY)]
        operands = (feats, target_gram)
    else:
        in_specs = [pl.BlockSpec((tm, tk), lambda i, kk: (i, kk)),
                    pl.BlockSpec((m, tk), lambda i, kk: (0, kk)),
                    pl.BlockSpec(memory_space=pl.ANY)]
        operands = (feats, feats, target_gram)

    partials = pl.pallas_call(
        kernel,
        grid=(grid_m, nk),
        out_shape=jax.ShapeDtypeStruct((8 * grid_m, 128), jnp.float32),
        in_specs=in_specs,
        out_specs=pl.BlockSpec((8, 128), lambda i, kk: (i, 0)),
        scratch_shapes=[
            pltpu.VMEM((tm, m), jnp.float32),     # x-gram accumulator (VMEM only)
            pltpu.VMEM((tm, m), jnp.float32),     # target row slab (single buffer)
            pltpu.SemaphoreType.DMA(()),
        ],
        compiler_params=pltpu.CompilerParams(
            dimension_semantics=("parallel", "arbitrary"),
            vmem_limit_bytes=_vmem_limit(rows_per_step, tk, tm, m, cap),
        ),
    )(*operands)
    # Each (8,128) row-block slab is filled with its partial SSE; pick one per
    # block, sum across row blocks, divide by the true element count.
    loss = jnp.sum(partials[0::8, 0]) * inv_count
    # forward() returns x unchanged; loss is exposed as a side output.
    return x, loss


class StyleLoss:
    """JAX/Pallas port of the PyTorch StyleLoss module."""

    def __init__(self, target_feature):
        self.target = gram_matrix(target_feature)   # .detach(): plain constant
        self.loss = None

    def __call__(self, x):
        x_out, self.loss = style_loss_forward(x, self.target)
        return x_out


# ---------------------------------------------------------------------------
# self-test
# ---------------------------------------------------------------------------
if __name__ == "__main__":
    key = jax.random.PRNGKey(0)
    k_tgt, k_x = jax.random.split(key)

    B, C, H, W = 2, 4, 16, 16
    target_feature = jax.random.normal(k_tgt, (B, C, H, W), dtype=jnp.float32)
    x = jax.random.normal(k_x, (B, C, H, W), dtype=jnp.float32)

    module = StyleLoss(target_feature)
    y = module(x)
    y = jax.block_until_ready(y)
    loss = jax.block_until_ready(module.loss)

    # Pure-JAX f32 reference (kernel uses bf16 matmul inputs -> loose rtol).
    def ref_gram(t):
        b, c, h, w = t.shape
        f = t.reshape(b * c, h * w)
        return (f @ f.T) / (b * c * h * w)

    ref_loss = jnp.mean((ref_gram(x) - ref_gram(target_feature)) ** 2)

    assert jnp.allclose(y, x), "forward must return x unchanged"
    assert jnp.allclose(module.target, ref_gram(target_feature),
                        rtol=3e-2, atol=5e-4), "target gram mismatch"
    assert jnp.allclose(loss, ref_loss, rtol=5e-2, atol=1e-6), (loss, ref_loss)

    print("KERNEL_OK")
</pallas_src>

<mosaic_0001>
module attributes {stable_mosaic.version = 11 : i64} {
  func.func @_gram_kernel(%arg0: i32, %arg1: i32, %arg2: memref<8x256xf32, #tpu.memory_space<vmem>>, %arg3: memref<8x8xf32, #tpu.memory_space<vmem>>) attributes {dimension_semantics = [#tpu.dimension_semantics<parallel>, #tpu.dimension_semantics<arbitrary>], iteration_bounds = array<i64: 1, 1>, scalar_prefetch = 0 : i64, scratch_operands = 0 : i64, tpu.core_type = #tpu.core_type<tc>, window_params = [{transform_indices = @transform_0, window_bounds = array<i64: 8, 256>}, {transform_indices = @transform_1, window_bounds = array<i64: 8, 8>}]} {
    %c0_i32 = arith.constant 0 : i32
    %0 = arith.cmpi eq, %arg1, %c0_i32 : i32
    %1 = arith.extui %0 : i1 to i32
    %c0_i32_0 = arith.constant 0 : i32
    %2 = arith.cmpi ne, %1, %c0_i32_0 : i32
    scf.if %2 {
      %cst_8 = arith.constant 0.000000e+00 : f32
      %12 = vector.broadcast %cst_8 : f32 to vector<8x8xf32>
      %c0_9 = arith.constant 0 : index
      %c0_10 = arith.constant 0 : index
      %13 = vector.load %arg3[%c0_9, %c0_10] : memref<8x8xf32, #tpu.memory_space<vmem>>, vector<8x8xf32>
      tpu.vector_store %arg3[%c0_9, %c0_10], %12 {strides = array<i32>} : memref<8x8xf32, #tpu.memory_space<vmem>>, vector<8x8xf32>,
    } else {
    }
    %c0 = arith.constant 0 : index
    %c0_1 = arith.constant 0 : index
    %3 = vector.load %arg2[%c0, %c0_1] : memref<8x256xf32, #tpu.memory_space<vmem>>, vector<8x256xf32>
    %4 = arith.truncf %3 : vector<8x256xf32> to vector<8x256xbf16>
    %c0_2 = arith.constant 0 : index
    %c0_3 = arith.constant 0 : index
    %5 = vector.load %arg3[%c0_2, %c0_3] : memref<8x8xf32, #tpu.memory_space<vmem>>, vector<8x8xf32>
    %cst = arith.constant dense<0.000000e+00> : vector<8x8xf32>
    %6 = tpu.matmul %4, %4, %cst {dimension_numbers = #tpu.dot_dimension_numbers<[1], [1], [0], [0], [0, 0, 1, 0], [], []>} : vector<8x256xbf16>, vector<8x256xbf16>, vector<8x8xf32> -> vector<8x8xf32>
    %7 = arith.addf %5, %6 : vector<8x8xf32>
    %c0_4 = arith.constant 0 : index
    %c0_5 = arith.constant 0 : index
    %8 = vector.load %arg3[%c0_4, %c0_5] : memref<8x8xf32, #tpu.memory_space<vmem>>, vector<8x8xf32>
    tpu.vector_store %arg3[%c0_4, %c0_5], %7 {strides = array<i32>} : memref<8x8xf32, #tpu.memory_space<vmem>>, vector<8x8xf32>,
    %c0_i32_6 = arith.constant 0 : i32
    %9 = arith.cmpi eq, %arg1, %c0_i32_6 : i32
    %10 = arith.extui %9 : i1 to i32
    %c0_i32_7 = arith.constant 0 : i32
    %11 = arith.cmpi ne, %10, %c0_i32_7 : i32
    scf.if %11 {
      %c0_8 = arith.constant 0 : index
      %c0_9 = arith.constant 0 : index
      %12 = vector.load %arg3[%c0_8, %c0_9] : memref<8x8xf32, #tpu.memory_space<vmem>>, vector<8x8xf32>
      %cst_10 = arith.constant 4.8828125E-4 : f32
      %13 = vector.broadcast %cst_10 : f32 to vector<8x8xf32>
      %14 = arith.mulf %12, %13 : vector<8x8xf32>
      %c0_11 = arith.constant 0 : index
      %c0_12 = arith.constant 0 : index
      %15 = vector.load %arg3[%c0_11, %c0_12] : memref<8x8xf32, #tpu.memory_space<vmem>>, vector<8x8xf32>
      tpu.vector_store %arg3[%c0_11, %c0_12], %14 {strides = array<i32>} : memref<8x8xf32, #tpu.memory_space<vmem>>, vector<8x8xf32>,
    } else {
    }
    return
  }
  func.func @transform_0(%arg0: i32, %arg1: i32) -> (i32, i32) {
    %c0_i32 = arith.constant 0 : i32
    %c0_i32_0 = arith.constant 0 : i32
    return %c0_i32, %arg1 : i32, i32
  }
  func.func @transform_1(%arg0: i32, %arg1: i32) -> (i32, i32) {
    %c0_i32 = arith.constant 0 : i32
    %c0_i32_0 = arith.constant 0 : i32
    return %arg0, %c0_i32 : i32, i32
  }
}

</mosaic_0001>

<llo_original>
// kernel: tpu_custom_call.1
$region0: #{tpu_custom_call.1}
  #allocation0 [shape = 'u32[]', space=smem, size = 0x4, offset = 0x4, fixed_abs, tag = 'smem constant byte address 0x4 - core index']
  #allocation1 [shape = 'u32[72,128]{1,0:T(1,128)}', space=vmem, size = 0x9000, scoped, tag = 'internal scratch']
  %s0 = inlined_call_operand.hbm [shape: f32[8,256], index: 0, kind: input, shape index: {}]
  %s1 = inlined_call_operand.hbm [shape: f32[8,8], index: 1, kind: output, shape index: {}]
  %s2 = sld [smem:[#allocation0]]
  $region26: #{tpu_custom_call.1} parent=0
    _
  %s4 = ssub.s32 1, %s2
  %s5 = scalar_select 0, %s4, %s2
  $region1: #{tpu_custom_call.1} parent=0
    #allocation2 [shape = 'u8[8192]{0}', space=vmem, size = 0x2000, scoped, tag = 'input window, operand 0, single buffered']
    #allocation3 [shape = 's32[1]{0}', space=sflag, size = 0x4, scoped, tag = 'scoped memory for tpu_custom_call.1']
    #allocation4 [shape = 's32[1]{0}', space=sflag, size = 0x4, scoped, tag = 'scoped memory for tpu_custom_call.1']
    #allocation5 [shape = 'u8[4096]{0}', space=vmem, size = 0x1000, scoped, tag = 'output window, operand 0, single buffered']
    %6 = vsyncpa [#allocation3], 0
    %7 = vsyncpa [#allocation4], 0
    // Predicated region
    $region2: #{tpu_custom_call.1} parent=1 // pred_check
      _
    $region3: #{tpu_custom_call.1} parent=1 // pred_check_branch
      %9 = sbr.rel (0) target = $region5
    $region4: #{tpu_custom_call.1} parent=1 // pred_region
      %11 = vsyncadd [#allocation3], 0
      %s13 = sshll.u32 %s0, 4
      %s14 = int_to_ptr.hbm [resolvable:$true] %s13
      %s15 = sshll.u32 [#allocation2], 4
      %s16 = int_to_ptr.vmem [resolvable:$true] %s15
      %18 = dma.hbm_to_vmem [thread:$0]  %s14, 256, %s16, [#allocation3]
    $region5: #{tpu_custom_call.1} parent=1 // pred_fallthru
      _
    // Predicated region
    $region6: #{tpu_custom_call.1} parent=1 // pred_check
      _
    $region7: #{tpu_custom_call.1} parent=1 // pred_check_branch
      %20 = sbr.rel (0) target = $region9
    $region8: #{tpu_custom_call.1} parent=1 // pred_region
      %22 = dma.done [#allocation3], 256
    $region9: #{tpu_custom_call.1} parent=1 // pred_fallthru
      _
    %p24 = scmp.eq.s32.totalorder 0, 0
    // Predicated region
    $region10: #{tpu_custom_call.1} parent=1 // pred_check
      %p25 = pneg %p24
    $region11: #{tpu_custom_call.1} parent=1 // pred_check_branch
      %27 = sbr.rel (%p25) target = $region13
    $region12: #{tpu_custom_call.1} parent=1 // pred_region
      %vm28 = vcmask 64512
      %29 = vst.msk [vmem:[#allocation5] sm:$0xff] %vm28, 0.0
    $region13: #{tpu_custom_call.1} parent=1 // pred_fallthru
      _
    %v30 = vld [vmem:[#allocation2] sm:$0xff]
    %v31 = vld [vmem:[#allocation2 + $0x8] sm:$0xff]
    %v32 = vpack.c.bf16 %v30, %v30
    %v33 = vpack.c.bf16 %v31, %v31
    %v34 = vld [vmem:[#allocation5] sm:$0xff]
    %35 = vmatpush.bf16.xpose.msra.mxu0 0
    %36 = vmatpush.bf16.xpose.msra.mxu0 0
    %37 = vmatpush.bf16.xpose.msra.mxu0 0
    %38 = vmatpush.bf16.xpose.msra.mxu0 0
    %39 = vmatpush.bf16.xpose.msra.mxu0 0
    %40 = vmatpush.bf16.xpose.msra.mxu0 0
    %41 = vmatpush.bf16.xpose.msra.mxu0 0
    %42 = vmatpush.bf16.xpose.msra.mxu0 %v32
    %43 = vmatmul.bf16.gmra.mxu0 %v32
    %v44 = vpop.f32.mrf.mxu0
    %v45 = vadd.f32 0.0, %v44
    %v46 = vpop.f32.mrf.mxu0
    %47 = vdwg.mxu0
    %48 = vmatpush.bf16.xpose.msra.mxu0 0
    %49 = vmatpush.bf16.xpose.msra.mxu0 0
    %50 = vmatpush.bf16.xpose.msra.mxu0 0
    %51 = vmatpush.bf16.xpose.msra.mxu0 0
    %52 = vmatpush.bf16.xpose.msra.mxu0 0
    %53 = vmatpush.bf16.xpose.msra.mxu0 0
    %54 = vmatpush.bf16.xpose.msra.mxu0 0
    %55 = vmatpush.bf16.xpose.msra.mxu0 %v33
    %56 = vmatmul.bf16.gmra.mxu0 %v33
    %v57 = vpop.f32.mrf.mxu0
    %v58 = vadd.f32 %v45, %v57
    %v59 = vpop.f32.mrf.mxu0
    %60 = vdwg.mxu0
    %v61 = vadd.f32 %v34, %v58
    %vm62 = vcmask 64512
    %63 = vst.msk [vmem:[#allocation5] sm:$0xff] %vm62, %v61
    // Predicated region
    $region14: #{tpu_custom_call.1} parent=1 // pred_check
      %p64 = pneg %p24
    $region15: #{tpu_custom_call.1} parent=1 // pred_check_branch
      %66 = sbr.rel (%p64) target = $region17
    $region16: #{tpu_custom_call.1} parent=1 // pred_region
      %v67 = vld [vmem:[#allocation5] sm:$0xff]
      %v68 = vmul.f32 %v67, 0.00048828125
      %69 = vst.msk [vmem:[#allocation5] sm:$0xff] %vm62, %v68
    $region17: #{tpu_custom_call.1} parent=1 // pred_fallthru
      _
    // Predicated region
    $region18: #{tpu_custom_call.1} parent=1 // pred_check
      _
    $region19: #{tpu_custom_call.1} parent=1 // pred_check_branch
      %71 = sbr.rel (0) target = $region21
    $region20: #{tpu_custom_call.1} parent=1 // pred_region
      %73 = vsyncadd [#allocation4], 0
      %s75 = sshll.u32 [#allocation5], 4
      %s76 = int_to_ptr.vmem [resolvable:$true] %s75
      %s77 = sshll.u32 %s1, 4
      %s78 = int_to_ptr.hbm [resolvable:$true] %s77
      %80 = dma.vmem_to_hbm [thread:$0]  %s76, 128, %s78, [#allocation4]
    $region21: #{tpu_custom_call.1} parent=1 // pred_fallthru
      _
    // Predicated region
    $region22: #{tpu_custom_call.1} parent=1 // pred_check
      _
    $region23: #{tpu_custom_call.1} parent=1 // pred_check_branch
      %82 = sbr.rel (0) target = $region25
    $region24: #{tpu_custom_call.1} parent=1 // pred_region
      %84 = dma.done [#allocation4], 128
    $region25: #{tpu_custom_call.1} parent=1 // pred_fallthru
      _
    %85 = vsyncpa [#allocation3], 1
    %86 = vsyncpa [#allocation4], 1

</llo_original>
